<compile_context>
chip_gen: v7x
topology: tpu7x:2x2x1
jax: 0.10.0
libtpu: 0.0.40
codegen_flags: <defaults>
</compile_context>

<pallas_src>
import jax
import jax.numpy as jnp
from jax.experimental import pallas as pl
from jax.experimental.pallas import tpu as pltpu


def _round_up(x, m):
    return ((x + m - 1) // m) * m


def _linear_kernel(x_ref, w_ref, b_ref, o_ref):
    """One batch tile of y = x @ W^T + b for nn.Linear(F, 1).

    x_ref: [tile_b, F] VMEM (streamed, f32 or bf16)
    w_ref: [1, F]      VMEM (resident across the whole grid)
    b_ref: [1]         SMEM scalar bias (f32)
    o_ref: [tile_b, 1] VMEM output block
    """
    x = x_ref[...].astype(jnp.float32)
    w = w_ref[...].astype(jnp.float32)
    # N=1 output: VPU multiply + XLU lane reduce. keepdims avoids the
    # sublane->lane relayout a reshape(1,-1) store would force. No MXU.
    s = jnp.sum(x * w, axis=-1, keepdims=True)          # [tile_b, 1] f32
    o_ref[...] = (s + b_ref[0]).astype(o_ref.dtype)


def _pick_tiling(B, F, itemsize):
    """Generation-aware (tile_b, vmem_limit_bytes)."""
    try:
        vmem_bytes = pltpu.get_tpu_info().vmem_capacity_bytes
    except Exception:
        vmem_bytes = 128 * 1024 * 1024
    # VMEM footprint per row uses the lane-padded F, not F itself.
    bytes_per_row = _round_up(F, 128) * itemsize
    if vmem_bytes <= 64 * 1024 * 1024:
        # v7x: 64 MiB physical per TC -> keep x double-buffer <= ~24 MiB.
        budget, vmem_limit = 24 * 1024 * 1024, 32 * 1024 * 1024
    else:
        # v5e / v6e: 128 MiB physical -> let the tile grow well past the
        # default scoped limit (16/32 MiB) to amortize per-step overhead.
        budget, vmem_limit = 80 * 1024 * 1024, 100 * 1024 * 1024
    if B <= 8:
        return B, vmem_limit                   # single full-extent tile
    tile_b = max(8, (budget // (2 * bytes_per_row)) // 8 * 8)
    if B >= 2048:
        # Keep grid_b >= 2 so v7x's two TensorCores both get work
        # (harmless single extra step on 1-TC v5e/v6e).
        tile_b = min(tile_b, _round_up(pl.cdiv(B, 2), 8))
    tile_b = min(tile_b, max(8, (B // 8) * 8))  # never exceed the batch extent
    return tile_b, vmem_limit


def linear_forward(x, weight, bias, *, stream_bf16=False, tile_b=None):
    """Pallas equivalent of nn.Linear(n_feature, 1) forward.

    x:      [B, F] float32
    weight: [1, F] float32 (PyTorch nn.Linear weight layout, used as-is)
    bias:   [1]    float32
    stream_bf16: opt-in bf16 streaming of x/weight (f32 accumulation); changes
                 numerics vs f32 nn.Linear, so default is off.
    returns [B, 1] float32
    """
    B, F = x.shape
    if stream_bf16:
        x = x.astype(jnp.bfloat16)
        weight = weight.astype(jnp.bfloat16)
    itemsize = jnp.dtype(x.dtype).itemsize

    auto_tile, vmem_limit = _pick_tiling(B, F, itemsize)
    if tile_b is None:
        tile_b = auto_tile
    # No wrapper-side pad: ragged last block is handled by Pallas (garbage OOB
    # input rows only feed output rows whose writes are masked).
    grid_b = pl.cdiv(B, tile_b)

    return pl.pallas_call(
        _linear_kernel,
        out_shape=jax.ShapeDtypeStruct((B, 1), jnp.float32),
        grid_spec=pltpu.PrefetchScalarGridSpec(
            num_scalar_prefetch=0,
            grid=(grid_b,),
            in_specs=[
                # x: tiled over the batch grid axis (double-buffered stream).
                pl.BlockSpec((tile_b, F), lambda i: (i, 0)),
                # weight: constant index_map -> fetched once, stays resident.
                pl.BlockSpec((1, F), lambda i: (0, 0)),
                # bias: scalar in SMEM, no per-tile VMEM DMA.
                pl.BlockSpec(memory_space=pltpu.MemorySpace.SMEM),
            ],
            # (tile_b, 1) blocks of the (B, 1) result: sublane dim is a
            # multiple of 8 (or the full extent), lane dim is the full extent.
            out_specs=pl.BlockSpec((tile_b, 1), lambda i: (i, 0)),
        ),
        compiler_params=pltpu.CompilerParams(
            dimension_semantics=("parallel",),
            vmem_limit_bytes=vmem_limit,
        ),
        cost_estimate=pl.CostEstimate(
            flops=2 * B * F,
            transcendentals=0,
            bytes_accessed=B * F * itemsize + F * itemsize + 4 + B * 4,
        ),
    )(x, weight, bias)


if __name__ == "__main__":
    key = jax.random.PRNGKey(0)
    k_x, k_w, k_b, k_x2 = jax.random.split(key, 4)

    batch = 8
    n_feature = 32

    # Deterministic inputs (shapes match nn.Linear(n_feature, 1)).
    x = jax.random.normal(k_x, (batch, n_feature), dtype=jnp.float32)
    weight = jax.random.normal(k_w, (1, n_feature), dtype=jnp.float32) * 0.01
    bias = jax.random.normal(k_b, (1,), dtype=jnp.float32) * 0.01

    y = jax.block_until_ready(linear_forward(x, weight, bias))
    y_ref = x @ weight.T + bias
    assert y.shape == (batch, 1)
    assert jnp.allclose(y, y_ref, atol=1e-5, rtol=1e-5)

    # Ragged multi-tile path: B=1000 with a forced 256-row tile -> grid_b=4,
    # last block partially out of bounds (masked output writes, no wrapper pad).
    big_b = 1000
    x_big = jax.random.normal(k_x2, (big_b, n_feature), dtype=jnp.float32)
    y_big = jax.block_until_ready(linear_forward(x_big, weight, bias, tile_b=256))
    y_big_ref = x_big @ weight.T + bias
    assert y_big.shape == (big_b, 1)
    assert jnp.allclose(y_big, y_big_ref, atol=1e-5, rtol=1e-5)

    # Auto-tiled (generation-aware) path on the same data.
    y_auto = jax.block_until_ready(linear_forward(x_big, weight, bias))
    assert jnp.allclose(y_auto, y_big_ref, atol=1e-5, rtol=1e-5)

    print("KERNEL_OK")
</pallas_src>

<mosaic_0001>
module attributes {stable_mosaic.version = 11 : i64} {
  func.func @_linear_kernel(%arg0: i32, %arg1: memref<8x32xf32, #tpu.memory_space<vmem>>, %arg2: memref<1x32xf32, #tpu.memory_space<vmem>>, %arg3: memref<1xf32, #tpu.memory_space<smem>>, %arg4: memref<8x1xf32, #tpu.memory_space<vmem>>) attributes {dimension_semantics = [#tpu.dimension_semantics<parallel>], iteration_bounds = array<i64: 1>, scalar_prefetch = 0 : i64, scratch_operands = 0 : i64, tpu.core_type = #tpu.core_type<tc>, window_params = [{transform_indices = @transform_0, window_bounds = array<i64: 8, 32>}, {pipeline_mode = #tpu.pipeline_mode<synchronous>, transform_indices = @transform_1, window_bounds = array<i64: 1, 32>}, {transform_indices = @transform_2, window_bounds = array<i64: 1>}, {transform_indices = @transform_3, window_bounds = array<i64: 8, 1>}]} {
    %c0 = arith.constant 0 : index
    %c0_0 = arith.constant 0 : index
    %0 = vector.load %arg1[%c0, %c0_0] : memref<8x32xf32, #tpu.memory_space<vmem>>, vector<8x32xf32>
    %c0_1 = arith.constant 0 : index
    %c0_2 = arith.constant 0 : index
    %1 = vector.load %arg2[%c0_1, %c0_2] : memref<1x32xf32, #tpu.memory_space<vmem>>, vector<1x32xf32>
    %2 = vector.broadcast %1 : vector<1x32xf32> to vector<8x32xf32>
    %3 = arith.mulf %0, %2 : vector<8x32xf32>
    %cst = arith.constant dense<0.000000e+00> : vector<8xf32>
    %4 = vector.multi_reduction <add>, %3, %cst [1] : vector<8x32xf32> to vector<8xf32>
    %5 = vector.shape_cast %4 : vector<8xf32> to vector<8x1xf32>
    %c0_3 = arith.constant 0 : index
    %6 = memref.load %arg3[%c0_3] : memref<1xf32, #tpu.memory_space<smem>>
    %7 = vector.broadcast %6 : f32 to vector<8x1xf32>
    %8 = arith.addf %5, %7 : vector<8x1xf32>
    %c0_4 = arith.constant 0 : index
    %c0_5 = arith.constant 0 : index
    %9 = vector.load %arg4[%c0_4, %c0_5] : memref<8x1xf32, #tpu.memory_space<vmem>>, vector<8x1xf32>
    tpu.vector_store %arg4[%c0_4, %c0_5], %8 {strides = array<i32>} : memref<8x1xf32, #tpu.memory_space<vmem>>, vector<8x1xf32>,
    return
  }
  func.func @transform_0(%arg0: i32) -> (i32, i32) {
    %c0_i32 = arith.constant 0 : i32
    %c0_i32_0 = arith.constant 0 : i32
    return %arg0, %c0_i32 : i32, i32
  }
  func.func @transform_1(%arg0: i32) -> (i32, i32) {
    %c0_i32 = arith.constant 0 : i32
    %c0_i32_0 = arith.constant 0 : i32
    %c0_i32_1 = arith.constant 0 : i32
    return %c0_i32, %c0_i32_0 : i32, i32
  }
  func.func @transform_2(%arg0: i32) -> i32 {
    %c0_i32 = arith.constant 0 : i32
    %c0_i32_0 = arith.constant 0 : i32
    return %c0_i32 : i32
  }
  func.func @transform_3(%arg0: i32) -> (i32, i32) {
    %c0_i32 = arith.constant 0 : i32
    %c0_i32_0 = arith.constant 0 : i32
    return %arg0, %c0_i32 : i32, i32
  }
}

</mosaic_0001>

<llo_original>
// kernel: tpu_custom_call.1
$region0: #{tpu_custom_call.1}
  #allocation0 [shape = 'u32[]', space=smem, size = 0x4, offset = 0x4, fixed_abs, tag = 'smem constant byte address 0x4 - core index']
  #allocation1 [shape = 'u32[144,128]{1,0:T(1,128)}', space=vmem, size = 0x12000, scoped, tag = 'internal scratch']
  #allocation2 [shape = 'f32[1]{0:T(128)S(6)}', space=smem, size = 0x200, scoped, tag = 'scoped memory for tpu_custom_call.1']
  %s0 = inlined_call_operand.hbm [shape: f32[8,32], index: 0, kind: input, shape index: {}]
  %s1 = inlined_call_operand.hbm [shape: f32[1,32], index: 1, kind: input, shape index: {}]
  %s2 = inlined_call_operand.<no memory space> [shape: f32[1], index: 2, kind: input, shape index: {}]
  %s3 = inlined_call_operand.hbm [shape: f32[8,1], index: 3, kind: output, shape index: {}]
  %s4 = sld [smem:[#allocation0]]
  $region30: #{tpu_custom_call.1} parent=0
    _
  %s6 = ssub.s32 1, %s4
  %s7 = scalar_select 0, %s6, %s4
  %8 = sst [smem:[#allocation2]] %s2
  $region1: #{tpu_custom_call.1} parent=0
    #allocation3 [shape = 'u8[4096]{0}', space=vmem, size = 0x1000, scoped, tag = 'input window, operand 0, single buffered']
    #allocation4 [shape = 's32[1]{0}', space=sflag, size = 0x4, scoped, tag = 'scoped memory for tpu_custom_call.1']
    #allocation5 [shape = 's32[1]{0}', space=sflag, size = 0x4, scoped, tag = 'scoped memory for tpu_custom_call.1']
    #allocation6 [shape = 'u8[512]{0}', space=vmem, size = 0x400, scoped, tag = 'input window, operand 1, single buffered']
    #allocation7 [shape = 's32[1]{0}', space=sflag, size = 0x4, scoped, tag = 'scoped memory for tpu_custom_call.1']
    #allocation8 [shape = 'u8[4096]{0}', space=vmem, size = 0x1000, scoped, tag = 'output window, operand 0, single buffered']
    %9 = vsyncpa [#allocation4], 0
    %10 = vsyncpa [#allocation7], 0
    %11 = vsyncpa [#allocation5], 0
    // Predicated region
    $region2: #{tpu_custom_call.1} parent=1 // pred_check
      _
    $region3: #{tpu_custom_call.1} parent=1 // pred_check_branch
      %13 = sbr.rel (0) target = $region5
    $region4: #{tpu_custom_call.1} parent=1 // pred_region
      %s15 = ssub.s32 128, 128
      %16 = vsyncadd [#allocation4], %s15
      %s18 = sshll.u32 [#allocation3], 4
      %s19 = int_to_ptr.vmem [resolvable:$true] %s18
      %21 = dma.hbm_to_vmem [thread:$0]  %s0, 128, %s19, [#allocation4]
    $region5: #{tpu_custom_call.1} parent=1 // pred_fallthru
      _
    // Predicated region
    $region6: #{tpu_custom_call.1} parent=1 // pred_check
      _
    $region7: #{tpu_custom_call.1} parent=1 // pred_check_branch
      %23 = sbr.rel (0) target = $region9
    $region8: #{tpu_custom_call.1} parent=1 // pred_region
      %s25 = ssub.s32 16, 16
      %26 = vsyncadd [#allocation7], %s25
      %s28 = sshll.u32 [#allocation6], 4
      %s29 = int_to_ptr.vmem [resolvable:$true] %s28
      %31 = dma.hbm_to_vmem [thread:$0]  %s1, 16, %s29, [#allocation7]
    $region9: #{tpu_custom_call.1} parent=1 // pred_fallthru
      _
    // Predicated region
    $region10: #{tpu_custom_call.1} parent=1 // pred_check
      _
    $region11: #{tpu_custom_call.1} parent=1 // pred_check_branch
      %33 = sbr.rel (0) target = $region13
    $region12: #{tpu_custom_call.1} parent=1 // pred_region
      _
    $region13: #{tpu_custom_call.1} parent=1 // pred_fallthru
      _
    // Predicated region
    $region14: #{tpu_custom_call.1} parent=1 // pred_check
      _
    $region15: #{tpu_custom_call.1} parent=1 // pred_check_branch
      %35 = sbr.rel (0) target = $region17
    $region16: #{tpu_custom_call.1} parent=1 // pred_region
      %36 = dma.done [#allocation4], 128
    $region17: #{tpu_custom_call.1} parent=1 // pred_fallthru
      _
    // Predicated region
    $region18: #{tpu_custom_call.1} parent=1 // pred_check
      _
    $region19: #{tpu_custom_call.1} parent=1 // pred_check_branch
      %38 = sbr.rel (0) target = $region21
    $region20: #{tpu_custom_call.1} parent=1 // pred_region
      %39 = dma.done [#allocation7], 16
    $region21: #{tpu_custom_call.1} parent=1 // pred_fallthru
      _
    %v40 = vld [vmem:[#allocation3] sm:$0xff]
    %v41 = vld [vmem:[#allocation6] sm:$0x1]
    %v43 = vlaneseq
    %v44 = vshrl.u32 %v43, 7
    %v45 = vsub.s32 0, %v44
    %v46 = vrot.slane %v41, %v45
    %v48 = vmul.f32 %v40, %v46
    %vm49 = vcmask 261120
    %v50 = vsel %vm49, %v48, 0.0
    %51 = vadd.xlane.f32.xlu0 %v50
    %v52 = vpop.xlane.xlu0 %51
    %s53 = sld [smem:[#allocation2]]
    %v54 = vstv %s53
    %v55 = vadd.f32 %v52, %v54
    %vm56 = vcmask 7168
    %57 = vst.msk [vmem:[#allocation8] sm:$0xff] %vm56, %v55
    // Predicated region
    $region22: #{tpu_custom_call.1} parent=1 // pred_check
      _
    $region23: #{tpu_custom_call.1} parent=1 // pred_check_branch
      %59 = sbr.rel (0) target = $region25
    $region24: #{tpu_custom_call.1} parent=1 // pred_region
      %s61 = ssub.s32 128, 128
      %62 = vsyncadd [#allocation5], %s61
      %s64 = sshll.u32 [#allocation8], 4
      %s65 = int_to_ptr.vmem [resolvable:$true] %s64
      %67 = dma.vmem_to_hbm [thread:$0]  %s65, 128, %s3, [#allocation5]
    $region25: #{tpu_custom_call.1} parent=1 // pred_fallthru
      _
    // Predicated region
    $region26: #{tpu_custom_call.1} parent=1 // pred_check
      _
    $region27: #{tpu_custom_call.1} parent=1 // pred_check_branch
      %69 = sbr.rel (0) target = $region29
    $region28: #{tpu_custom_call.1} parent=1 // pred_region
      %70 = dma.done [#allocation5], 128
    $region29: #{tpu_custom_call.1} parent=1 // pred_fallthru
      _
    %71 = vsyncpa [#allocation4], 1
    %72 = vsyncpa [#allocation7], 1
    %73 = vsyncpa [#allocation5], 1

</llo_original>
